<compile_context>
chip_gen: v5e
topology: v5e:2x2
jax: 0.10.0
libtpu: 0.0.40
codegen_flags: <defaults>
</compile_context>

<pallas_src>
import functools

import jax
import jax.numpy as jnp
from jax.experimental import pallas as pl
from jax.experimental.pallas import tpu as pltpu


def _ls_ce_kernel(logits_ref, target_ref, loss_ref, *, confidence, smoothing):
    """One batch tile: per-sample label-smoothed CE.

    logits_ref: (TN, C) float  (any float dtype; upcast to f32 inside)
    target_ref: (TN, 1) int32  (targets assumed in [0, C))
    loss_ref:   (TN, 1) float32 per-sample loss output
    """
    x = logits_ref[...].astype(jnp.float32)                      # (TN, C)
    inv_c = 1.0 / x.shape[-1]

    # Numerically stable pieces of log_softmax, without materializing it.
    m = jnp.max(x, axis=-1, keepdims=True)                       # (TN, 1)
    shifted = x - m                                              # (TN, C)
    lse = jnp.log(jnp.sum(jnp.exp(shifted), axis=-1, keepdims=True))  # (TN, 1)
    row_sum = jnp.sum(shifted, axis=-1, keepdims=True)           # (TN, 1)

    # Gather shifted[target] via a one-hot mask (TPU-friendly gather).
    tgt = target_ref[...]                                        # (TN, 1)
    cols = jax.lax.broadcasted_iota(jnp.int32, x.shape, 1)       # (TN, C)
    picked = jnp.sum(jnp.where(cols == tgt, shifted, 0.0),
                     axis=-1, keepdims=True)                     # (TN, 1)

    nll_loss = lse - picked                                      # -log_prob[target]
    smooth_loss = lse - row_sum * inv_c                          # -mean(log_probs)

    loss_ref[...] = confidence * nll_loss + smoothing * smooth_loss


def _choose_block_n(n, c, itemsize, tile_bytes_budget=4 * 1024 * 1024):
    """Largest multiple-of-8 divisor of n with ~tile_bytes_budget of logits."""
    rows = max(8, tile_bytes_budget // max(1, c * itemsize))
    rows = min(rows, n)
    if n % 8 != 0:
        return n                      # tiny / odd batch: single full tile
    bn = max(8, (rows // 8) * 8)
    while n % bn != 0:
        bn -= 8
    return bn


def label_smoothing_cross_entropy(logits, target, smoothing=0.1):
    """logits: (N, C) float; target: (N,) int in [0, C). Returns scalar f32."""
    N, C = logits.shape
    confidence = 1.0 - smoothing

    block_n = _choose_block_n(N, C, jnp.dtype(logits.dtype).itemsize)
    grid = (N // block_n,)

    target2d = target.astype(jnp.int32).reshape(N, 1)

    kernel = functools.partial(
        _ls_ce_kernel,
        confidence=float(confidence),   # plain Python floats -> baked constants
        smoothing=float(smoothing),
    )

    per_sample = pl.pallas_call(
        kernel,
        out_shape=jax.ShapeDtypeStruct((N, 1), jnp.float32),
        grid_spec=pltpu.PrefetchScalarGridSpec(
            num_scalar_prefetch=0,
            grid=grid,
            in_specs=[
                pl.BlockSpec((block_n, C), lambda i: (i, 0)),
                pl.BlockSpec((block_n, 1), lambda i: (i, 0)),
            ],
            out_specs=pl.BlockSpec((block_n, 1), lambda i: (i, 0)),
        ),
        compiler_params=pltpu.CompilerParams(
            dimension_semantics=("parallel",),
            vmem_limit_bytes=32 * 1024 * 1024,
        ),
    )(logits, target2d)

    # Final (tiny) reduction outside the kernel: avoids a serializing carried
    # accumulator and keeps the grid axis fully parallel.
    return jnp.mean(per_sample)


def _reference(logits, target, smoothing=0.1):
    confidence = 1.0 - smoothing
    log_probs = jax.nn.log_softmax(logits.astype(jnp.float32), axis=-1)
    nll = -jnp.take_along_axis(log_probs, target[:, None], axis=-1)[:, 0]
    smooth = -jnp.mean(log_probs, axis=-1)
    return jnp.mean(confidence * nll + smoothing * smooth)


if __name__ == "__main__":
    key = jax.random.PRNGKey(0)
    k1, k2 = jax.random.split(key)

    N, C = 8, 32  # small batch of logits over 32 classes
    logits = jax.random.normal(k1, (N, C), dtype=jnp.float32)
    target = jax.random.randint(k2, (N,), 0, C, dtype=jnp.int32)

    loss = label_smoothing_cross_entropy(logits, target, smoothing=0.1)
    loss = jax.block_until_ready(loss)

    ref = _reference(logits, target, smoothing=0.1)
    assert jnp.allclose(loss, ref, atol=1e-5, rtol=1e-5), (loss, ref)

    print("KERNEL_OK")
</pallas_src>

<mosaic_0001>
module attributes {stable_mosaic.version = 11 : i64} {
  func.func @_ls_ce_kernel(%arg0: i32, %arg1: memref<8x32xf32, #tpu.memory_space<vmem>>, %arg2: memref<8x1xi32, #tpu.memory_space<vmem>>, %arg3: memref<8x1xf32, #tpu.memory_space<vmem>>) attributes {dimension_semantics = [#tpu.dimension_semantics<parallel>], iteration_bounds = array<i64: 1>, scalar_prefetch = 0 : i64, scratch_operands = 0 : i64, tpu.core_type = #tpu.core_type<tc>, window_params = [{transform_indices = @transform_0, window_bounds = array<i64: 8, 32>}, {transform_indices = @transform_1, window_bounds = array<i64: 8, 1>}, {transform_indices = @transform_2, window_bounds = array<i64: 8, 1>}]} {
    %c0 = arith.constant 0 : index
    %c0_0 = arith.constant 0 : index
    %0 = vector.load %arg1[%c0, %c0_0] : memref<8x32xf32, #tpu.memory_space<vmem>>, vector<8x32xf32>
    %cst = arith.constant dense<0xFF800000> : vector<8xf32>
    %1 = vector.multi_reduction <maximumf>, %0, %cst [1] : vector<8x32xf32> to vector<8xf32>
    %2 = vector.shape_cast %1 : vector<8xf32> to vector<8x1xf32>
    %3 = vector.broadcast %2 : vector<8x1xf32> to vector<8x32xf32>
    %4 = arith.subf %0, %3 : vector<8x32xf32>
    %5 = math.exp %4 : vector<8x32xf32>
    %cst_1 = arith.constant dense<0.000000e+00> : vector<8xf32>
    %6 = vector.multi_reduction <add>, %5, %cst_1 [1] : vector<8x32xf32> to vector<8xf32>
    %7 = vector.shape_cast %6 : vector<8xf32> to vector<8x1xf32>
    %8 = math.log %7 : vector<8x1xf32>
    %cst_2 = arith.constant dense<0.000000e+00> : vector<8xf32>
    %9 = vector.multi_reduction <add>, %4, %cst_2 [1] : vector<8x32xf32> to vector<8xf32>
    %10 = vector.shape_cast %9 : vector<8xf32> to vector<8x1xf32>
    %c0_3 = arith.constant 0 : index
    %c0_4 = arith.constant 0 : index
    %11 = vector.load %arg2[%c0_3, %c0_4] : memref<8x1xi32, #tpu.memory_space<vmem>>, vector<8x1xi32>
    %12 = tpu.iota {dimensions = array<i32: 1>} : vector<8x32xi32>
    %13 = vector.broadcast %11 : vector<8x1xi32> to vector<8x32xi32>
    %14 = arith.cmpi eq, %12, %13 : vector<8x32xi32>
    %cst_5 = arith.constant 0.000000e+00 : f32
    %15 = vector.broadcast %cst_5 : f32 to vector<8x32xf32>
    %16 = arith.select %14, %4, %15 : vector<8x32xi1>, vector<8x32xf32>
    %cst_6 = arith.constant dense<0.000000e+00> : vector<8xf32>
    %17 = vector.multi_reduction <add>, %16, %cst_6 [1] : vector<8x32xf32> to vector<8xf32>
    %18 = vector.shape_cast %17 : vector<8xf32> to vector<8x1xf32>
    %19 = arith.subf %8, %18 : vector<8x1xf32>
    %cst_7 = arith.constant 3.125000e-02 : f32
    %20 = vector.broadcast %cst_7 : f32 to vector<8x1xf32>
    %21 = arith.mulf %10, %20 : vector<8x1xf32>
    %22 = arith.subf %8, %21 : vector<8x1xf32>
    %cst_8 = arith.constant 0.899999976 : f32
    %23 = vector.broadcast %cst_8 : f32 to vector<8x1xf32>
    %24 = arith.mulf %23, %19 : vector<8x1xf32>
    %cst_9 = arith.constant 1.000000e-01 : f32
    %25 = vector.broadcast %cst_9 : f32 to vector<8x1xf32>
    %26 = arith.mulf %25, %22 : vector<8x1xf32>
    %27 = arith.addf %24, %26 : vector<8x1xf32>
    %c0_10 = arith.constant 0 : index
    %c0_11 = arith.constant 0 : index
    %28 = vector.load %arg3[%c0_10, %c0_11] : memref<8x1xf32, #tpu.memory_space<vmem>>, vector<8x1xf32>
    tpu.vector_store %arg3[%c0_10, %c0_11], %27 {strides = array<i32>} : memref<8x1xf32, #tpu.memory_space<vmem>>, vector<8x1xf32>,
    return
  }
  func.func @transform_0(%arg0: i32) -> (i32, i32) {
    %c0_i32 = arith.constant 0 : i32
    %c0_i32_0 = arith.constant 0 : i32
    return %arg0, %c0_i32 : i32, i32
  }
  func.func @transform_1(%arg0: i32) -> (i32, i32) {
    %c0_i32 = arith.constant 0 : i32
    %c0_i32_0 = arith.constant 0 : i32
    return %arg0, %c0_i32 : i32, i32
  }
  func.func @transform_2(%arg0: i32) -> (i32, i32) {
    %c0_i32 = arith.constant 0 : i32
    %c0_i32_0 = arith.constant 0 : i32
    return %arg0, %c0_i32 : i32, i32
  }
}

</mosaic_0001>

<llo_original>
// kernel: tpu_custom_call.1
$region0: #{tpu_custom_call.1}
  #allocation0 [shape = 'u32[]', space=smem, size = 0x4, offset = 0x4, fixed_abs, tag = 'smem constant byte address 0x4 - core index']
  #allocation1 [shape = 'u32[72,128]{1,0:T(1,128)}', space=vmem, size = 0x9000, scoped, tag = 'internal scratch']
  %s0 = inlined_call_operand.vmem [shape: f32[8,32], index: 0, kind: input, shape index: {}]
  %s1 = inlined_call_operand.vmem [shape: s32[8,1], index: 1, kind: input, shape index: {}]
  %s2 = inlined_call_operand.vmem [shape: f32[8,1], index: 2, kind: output, shape index: {}]
  %s3 = sld [smem:[#allocation0]]
  $region18: #{tpu_custom_call.1} parent=0
    _
  %s5 = ssub.s32 1, %s3
  %s6 = scalar_select 0, %s5, %s3
  // Predicated region
  $region2: #{tpu_custom_call.1} parent=0 // pred_check
    _
  $region3: #{tpu_custom_call.1} parent=0 // pred_check_branch
    %8 = sbr.rel (0) target = $region5
  $region4: #{tpu_custom_call.1} parent=0 // pred_region
    _
  $region5: #{tpu_custom_call.1} parent=0 // pred_fallthru
    _
  // Predicated region
  $region6: #{tpu_custom_call.1} parent=0 // pred_check
    _
  $region7: #{tpu_custom_call.1} parent=0 // pred_check_branch
    %10 = sbr.rel (0) target = $region9
  $region8: #{tpu_custom_call.1} parent=0 // pred_region
    _
  $region9: #{tpu_custom_call.1} parent=0 // pred_fallthru
    _
  %v11 = vld [vmem:[%s0] sm:$0xff]
  %vm12 = vcmask 261120
  %v13 = vsel %vm12, %v11, -inf
  %14 = vmax.xlane.f32.xlu0 %v13
  %v15 = vpop.xlane.xlu0 %14
  %v16 = vsub.f32 %v11, %v15
  %v17 = vmul.f32 %v16, 1.442695
  %v18 = vpow.pop %v17
  %v19 = vsel %vm12, %v18, 0.0
  %20 = vadd.xlane.f32.xlu0 %v19
  %v21 = vpop.xlane.xlu0 %20
  %v22 = vlog2.pop %v21
  %v23 = vmul.f32 %v22, 0.6931472
  %v24 = vsel %vm12, %v16, 0.0
  %25 = vadd.xlane.f32.xlu0 %v24
  %v26 = vpop.xlane.xlu0 %25
  %v27 = vld [vmem:[%s1] sm:$0xff]
  %v28 = vlaneseq
  %v29 = vand.u32 %v28, 127
  %30 = vset.pattern.permute.xlu0 0
  %31 = vperm.xlu0 %30, %v27
  %v32 = vpop.permute.xlu0 %31
  %vm33 = vcmp.eq.s32.totalorder %v29, %v32
  %v34 = vsel %vm33, %v16, 0.0
  %v35 = vsel %vm12, %v34, 0.0
  %36 = vadd.xlane.f32.xlu0 %v35
  %v37 = vpop.xlane.xlu0 %36
  %v38 = vsub.f32 %v23, %v37
  %v39 = vmul.f32 %v26, 0.03125
  %v40 = vsub.f32 %v23, %v39
  %v41 = vmul.f32 %v38, 0.9
  %v42 = vmul.f32 %v40, 0.1
  %v43 = vadd.f32 %v41, %v42
  %vm44 = vcmask 7168
  %45 = vst.msk [vmem:[%s2] sm:$0xff] %vm44, %v43
  // Predicated region
  $region10: #{tpu_custom_call.1} parent=0 // pred_check
    _
  $region11: #{tpu_custom_call.1} parent=0 // pred_check_branch
    %47 = sbr.rel (0) target = $region13
  $region12: #{tpu_custom_call.1} parent=0 // pred_region
    _
  $region13: #{tpu_custom_call.1} parent=0 // pred_fallthru
    _
  // Predicated region
  $region14: #{tpu_custom_call.1} parent=0 // pred_check
    _
  $region15: #{tpu_custom_call.1} parent=0 // pred_check_branch
    %49 = sbr.rel (0) target = $region17
  $region16: #{tpu_custom_call.1} parent=0 // pred_region
    _
  $region17: #{tpu_custom_call.1} parent=0 // pred_fallthru
    _

</llo_original>
